<compile_context>
chip_gen: v7x
topology: tpu7x:2x2x1
jax: 0.10.0
libtpu: 0.0.40
codegen_flags: <defaults>
</compile_context>

<pallas_src>
import math

import jax
import jax.numpy as jnp
from jax import lax
from jax.experimental import pallas as pl
from jax.experimental.pallas import tpu as pltpu

_MiB = 1 << 20


# -----------------------------------------------------------------------------
# forward(): ego embedding built with direct HBM->HBM DMAs (no VMEM staging)
# -----------------------------------------------------------------------------
def _concat_hbm_kernel(n_users: int, n_items: int):
    """Copies [user_table; item_table] into the output purely via DMA."""

    def kernel(user_hbm, item_hbm, ego_hbm, sem):
        cp_u = pltpu.make_async_copy(user_hbm, ego_hbm.at[0:n_users], sem.at[0])
        cp_i = pltpu.make_async_copy(
            item_hbm, ego_hbm.at[n_users:n_users + n_items], sem.at[1]
        )
        cp_u.start()
        cp_i.start()
        cp_u.wait()
        cp_i.wait()

    return kernel


def mf_forward(user_emb: jax.Array, item_emb: jax.Array):
    """Pallas equivalent of MF.forward().

    Returns (user_all_embeddings, item_all_embeddings, embeddings_list) with
    the same semantics as the PyTorch module.  If downstream code never
    consumes `embeddings_list[0]` directly, skipping this call avoids a full
    read+write of both tables -- rating()/bpr_loss only need the split tables.
    """
    n_users, d = user_emb.shape
    n_items, d2 = item_emb.shape
    assert d == d2
    assert user_emb.dtype == item_emb.dtype

    total_bytes = (n_users + n_items) * d * jnp.dtype(user_emb.dtype).itemsize

    ego = pl.pallas_call(
        _concat_hbm_kernel(n_users, n_items),
        out_shape=jax.ShapeDtypeStruct((n_users + n_items, d), user_emb.dtype),
        in_specs=[
            pl.BlockSpec(memory_space=pl.ANY),   # user table stays in HBM
            pl.BlockSpec(memory_space=pl.ANY),   # item table stays in HBM
        ],
        out_specs=pl.BlockSpec(memory_space=pl.ANY),  # ego written via DMA
        scratch_shapes=[pltpu.SemaphoreType.DMA((2,))],
        cost_estimate=pl.CostEstimate(
            flops=0, transcendentals=0, bytes_accessed=2 * total_bytes
        ),
    )(user_emb, item_emb)

    # torch.split returns views of ego; returning the original (immutable)
    # tables is semantically identical and avoids two extra full-table copies.
    user_all = user_emb
    item_all = item_emb
    embeddings_list = [ego]
    return user_all, item_all, embeddings_list


# -----------------------------------------------------------------------------
# rating(): tiled MXU matmul  u [Bu, D] @ items.T [D, Bi] -> [Bu, Bi]
# -----------------------------------------------------------------------------
def _rating_kernel(u_ref, i_ref, o_ref):
    # Contract on the last dim of both operands (u [tm,D] x items [tn,D]) with
    # f32 accumulation on the MXU.  Mosaic may insert an in-VMEM transpose of
    # the item tile before the MXU (XLU work); that is hidden under the
    # HBM-bound output writeback.  If the same item table is reused across
    # many rating() calls, pre-transposing it once to (D, Bi) in the caller
    # and contracting ((1,), (0,)) removes that per-tile transpose.
    o_ref[...] = lax.dot_general(
        u_ref[...],
        i_ref[...],
        dimension_numbers=(((1,), (1,)), ((), ())),
        preferred_element_type=jnp.float32,
    ).astype(o_ref.dtype)


def _round_up(x: int, m: int) -> int:
    return ((x + m - 1) // m) * m


def _vmem_budget_bytes():
    """(tile_budget_bytes, vmem_limit_bytes) for the current TPU generation."""
    try:
        kind = jax.devices()[0].device_kind.lower()
    except Exception:
        kind = ""
    if "v7" in kind:
        # v7x: only 64 MiB physical VMEM per TensorCore -> smaller tile cap;
        # raise the scoped limit above the 32 MiB default but keep headroom.
        return 36 * _MiB, 48 * _MiB
    if "v5" in kind or "v6" in kind:
        # v5e/v6e: 128 MiB physical VMEM; the default scoped limit (16/32 MiB)
        # is far below it -- raise it so large tiles are legal.
        return 72 * _MiB, 96 * _MiB
    # Unknown chip: assume the small (64 MiB) VMEM.
    return 36 * _MiB, 48 * _MiB


_MAX_TILE = 2048
_MIN_TILE = 256


def _select_tiles(bu, bi, d, in_itemsize, out_itemsize, tile_budget):
    """VMEM-budget-driven tile selection (NOT tied to the physical MXU size).

    rating() has arithmetic intensity ~ d/2 FLOP per output byte, i.e. it is
    HBM (output-writeback) bound on every TPU generation.  Large tiles
    amortize the ~0.35us per-grid-step overhead and keep the DMAs large and
    lane-dense; a large tm additionally cuts how many times the item table is
    re-streamed from HBM (extra read traffic ~ d*in/(tm*out) of the output).
    """
    tm = min(_round_up(bu, 8), _MAX_TILE)
    tn = min(_round_up(bi, 128), _MAX_TILE)

    def vmem_use(tm_, tn_):
        # double-buffered input tiles + double-buffered output tile
        return 2 * (tm_ + tn_) * d * in_itemsize + 2 * tm_ * tn_ * out_itemsize

    # Shrink tn first (keeps tm large -> fewer item-table re-reads), then tm.
    while vmem_use(tm, tn) > tile_budget:
        if tn > 512:
            tn = _round_up(tn // 2, 128)
        elif tm > 512:
            tm = _round_up(tm // 2, 8)
        elif tn > _MIN_TILE:
            tn = _round_up(tn // 2, 128)
        elif tm > _MIN_TILE:
            tm = _round_up(tm // 2, 8)
        else:
            break

    # Megacore (v7x: 2 TensorCores/chip): keep >= 2 blocks along a parallel
    # grid axis when the problem is big enough to split, so both cores work.
    if pl.cdiv(bu, tm) == 1 and pl.cdiv(bi, tn) == 1 and bu >= 16:
        tm = _round_up((bu + 1) // 2, 8)

    return tm, tn


def mf_rating(
    u_g_embeddings: jax.Array,
    pos_i_g_embeddings: jax.Array,
    *,
    tm: int | None = None,
    tn: int | None = None,
    out_dtype=None,
):
    """Pallas equivalent of MF.rating(): u @ items.T, tiled over (Bu, Bi).

    out_dtype=None keeps the input dtype (PyTorch semantics).  Fast path for
    large rating matrices: pass out_dtype=jnp.bfloat16 (halves the dominant
    HBM stream) and/or feed the embedding tables as bf16 -- accumulation is
    always f32 on the MXU.
    """
    bu, d = u_g_embeddings.shape
    bi, d2 = pos_i_g_embeddings.shape
    assert d == d2

    if out_dtype is None:
        out_dtype = jnp.result_type(u_g_embeddings.dtype, pos_i_g_embeddings.dtype)

    in_itemsize = max(
        jnp.dtype(u_g_embeddings.dtype).itemsize,
        jnp.dtype(pos_i_g_embeddings.dtype).itemsize,
    )
    out_itemsize = jnp.dtype(out_dtype).itemsize

    # Lane-dense output: if the item batch is narrower than one 128-lane vreg
    # row, zero-pad it so output stores are not masked partial writes; the
    # padded columns are sliced off afterwards (cheap at this size).
    items = pos_i_g_embeddings
    bi_padded = bi
    if bi < 128:
        bi_padded = 128
        items = jnp.pad(items, ((0, bi_padded - bi), (0, 0)))

    tile_budget, vmem_limit = _vmem_budget_bytes()
    auto_tm, auto_tn = _select_tiles(
        bu, bi_padded, d, in_itemsize, out_itemsize, tile_budget
    )
    if tm is None:
        tm = auto_tm
    if tn is None:
        tn = auto_tn

    grid = (pl.cdiv(bu, tm), pl.cdiv(bi_padded, tn))

    cost = pl.CostEstimate(
        flops=2 * bu * bi_padded * d,
        transcendentals=0,
        bytes_accessed=(bu * d + grid[0] * bi_padded * d) * in_itemsize
        + bu * bi_padded * out_itemsize,
    )

    out = pl.pallas_call(
        _rating_kernel,
        out_shape=jax.ShapeDtypeStruct((bu, bi_padded), out_dtype),
        grid=grid,
        in_specs=[
            # user tile: block index constant along j -> stays resident.
            pl.BlockSpec((tm, d), lambda i, j: (i, 0)),
            # item tile: streamed along the inner (j) axis.
            pl.BlockSpec((tn, d), lambda i, j: (j, 0)),
        ],
        out_specs=pl.BlockSpec((tm, tn), lambda i, j: (i, j)),
        compiler_params=pltpu.CompilerParams(
            dimension_semantics=("parallel", "parallel"),
            vmem_limit_bytes=vmem_limit,
        ),
        cost_estimate=cost,
    )(u_g_embeddings, items)

    if bi_padded != bi:
        out = out[:, :bi]
    return out


# -----------------------------------------------------------------------------
# Deterministic parameter init (matches nn.init.xavier_uniform_ semantics)
# -----------------------------------------------------------------------------
def xavier_uniform(key, shape, dtype=jnp.float32):
    fan_out, fan_in = shape  # torch semantics for a 2-D weight
    bound = math.sqrt(6.0 / (fan_in + fan_out))
    return jax.random.uniform(key, shape, dtype, minval=-bound, maxval=bound)


# TODO(synk): norm_adj / sparse_norm_adj (scipy COO -> torch sparse tensor) is
# constructed in __init__ but never used in forward(); not translated.


if __name__ == "__main__":
    n_users, n_items, emb_size = 16, 24, 32
    key = jax.random.PRNGKey(0)
    k_user, k_item, k_idx, k_u2, k_i2, k_u3, k_i3 = jax.random.split(key, 7)

    user_emb = xavier_uniform(k_user, (n_users, emb_size))
    item_emb = xavier_uniform(k_item, (n_items, emb_size))

    # forward()
    user_all, item_all, emb_list = mf_forward(user_emb, item_emb)
    jax.block_until_ready(emb_list[0])
    jax.block_until_ready(user_all)
    jax.block_until_ready(item_all)

    # rating() on a small batch of gathered embeddings (Bi < 128 -> lane pad)
    batch = 8
    u_idx = jax.random.randint(k_idx, (batch,), 0, n_users)
    scores = mf_rating(user_all[u_idx], item_all)
    jax.block_until_ready(scores)

    # reference checks
    ego_ref = jnp.concatenate([user_emb, item_emb], axis=0)
    assert jnp.allclose(emb_list[0], ego_ref)
    assert jnp.allclose(user_all, user_emb)
    assert jnp.allclose(item_all, item_emb)
    scores_ref = user_emb[u_idx] @ item_emb.T
    assert jnp.allclose(scores, scores_ref, atol=1e-5, rtol=1e-5)

    # rating check exercising a >1-block grid (megacore split) + ragged tiles
    bu2, bi2 = 200, 300
    u2 = xavier_uniform(k_u2, (bu2, emb_size))
    i2 = xavier_uniform(k_i2, (bi2, emb_size))
    scores2 = mf_rating(u2, i2)
    jax.block_until_ready(scores2)
    ref2 = u2 @ i2.T
    assert jnp.allclose(scores2, ref2, atol=1e-5, rtol=1e-5)

    # bf16-output fast path (halves the dominant HBM writeback stream)
    scores2_bf16 = mf_rating(u2, i2, out_dtype=jnp.bfloat16)
    jax.block_until_ready(scores2_bf16)
    assert jnp.allclose(scores2_bf16.astype(jnp.float32), ref2, atol=1e-2, rtol=2e-2)

    # larger case: multiple 2048-sized tiles on both grid axes, partial edges
    bu3, bi3, d3 = 2304, 2432, 64
    u3 = xavier_uniform(k_u3, (bu3, d3))
    i3 = xavier_uniform(k_i3, (bi3, d3))
    scores3 = mf_rating(u3, i3)
    jax.block_until_ready(scores3)
    ref3 = jnp.matmul(u3, i3.T, precision=jax.lax.Precision.HIGHEST)
    assert jnp.allclose(scores3, ref3, atol=1e-4, rtol=1e-4)

    print("KERNEL_OK")
</pallas_src>

<mosaic_0001>
module attributes {stable_mosaic.version = 11 : i64} {
  func.func @kernel(%arg0: memref<16x32xf32, #tpu.memory_space<any>>, %arg1: memref<24x32xf32, #tpu.memory_space<any>>, %arg2: memref<40x32xf32, #tpu.memory_space<any>>, %arg3: memref<2x!tpu.dma_semaphore, #tpu.memory_space<semaphore_mem>>) attributes {dimension_semantics = [], scalar_prefetch = 0 : i64, scratch_operands = 1 : i64, tpu.core_type = #tpu.core_type<tc>} {
    %c0_i32 = arith.constant 0 : i32
    %c0_i32_0 = arith.constant 0 : i32
    %c0_i32_1 = arith.constant 0 : i32
    %0 = tpu.memref_slice %arg2[%c0_i32_0, %c0_i32_1] : memref<40x32xf32, #tpu.memory_space<any>> -> memref<16x32xf32, #tpu.memory_space<any>>
    %1 = tpu.memref_slice %arg3[%c0_i32] : memref<2x!tpu.dma_semaphore, #tpu.memory_space<semaphore_mem>> -> memref<1x!tpu.dma_semaphore, #tpu.memory_space<semaphore_mem>>
    %2 = tpu.memref_squeeze %1 : memref<1x!tpu.dma_semaphore, #tpu.memory_space<semaphore_mem>> -> memref<!tpu.dma_semaphore, #tpu.memory_space<semaphore_mem>>
    tpu.enqueue_dma source(%arg0 : memref<16x32xf32, #tpu.memory_space<any>>) target(%0 : memref<16x32xf32, #tpu.memory_space<any>>) target_semaphore(%2 : memref<!tpu.dma_semaphore, #tpu.memory_space<semaphore_mem>>)
    %c1_i32 = arith.constant 1 : i32
    %c16_i32 = arith.constant 16 : i32
    %c0_i32_2 = arith.constant 0 : i32
    %3 = tpu.memref_slice %arg2[%c16_i32, %c0_i32_2] : memref<40x32xf32, #tpu.memory_space<any>> -> memref<24x32xf32, #tpu.memory_space<any>>
    %4 = tpu.memref_slice %arg3[%c1_i32] : memref<2x!tpu.dma_semaphore, #tpu.memory_space<semaphore_mem>> -> memref<1x!tpu.dma_semaphore, #tpu.memory_space<semaphore_mem>>
    %5 = tpu.memref_squeeze %4 : memref<1x!tpu.dma_semaphore, #tpu.memory_space<semaphore_mem>> -> memref<!tpu.dma_semaphore, #tpu.memory_space<semaphore_mem>>
    tpu.enqueue_dma source(%arg1 : memref<24x32xf32, #tpu.memory_space<any>>) target(%3 : memref<24x32xf32, #tpu.memory_space<any>>) target_semaphore(%5 : memref<!tpu.dma_semaphore, #tpu.memory_space<semaphore_mem>>)
    %c0_i32_3 = arith.constant 0 : i32
    %c0_i32_4 = arith.constant 0 : i32
    %c0_i32_5 = arith.constant 0 : i32
    %6 = tpu.memref_slice %arg2[%c0_i32_4, %c0_i32_5] : memref<40x32xf32, #tpu.memory_space<any>> -> memref<16x32xf32, #tpu.memory_space<any>>
    %7 = tpu.memref_slice %arg3[%c0_i32_3] : memref<2x!tpu.dma_semaphore, #tpu.memory_space<semaphore_mem>> -> memref<1x!tpu.dma_semaphore, #tpu.memory_space<semaphore_mem>>
    %8 = tpu.memref_squeeze %7 : memref<1x!tpu.dma_semaphore, #tpu.memory_space<semaphore_mem>> -> memref<!tpu.dma_semaphore, #tpu.memory_space<semaphore_mem>>
    tpu.wait_dma2 semaphore(%8 : memref<!tpu.dma_semaphore, #tpu.memory_space<semaphore_mem>>) src(%arg0 : memref<16x32xf32, #tpu.memory_space<any>>) dst(%6 : memref<16x32xf32, #tpu.memory_space<any>>)
    %c1_i32_6 = arith.constant 1 : i32
    %c16_i32_7 = arith.constant 16 : i32
    %c0_i32_8 = arith.constant 0 : i32
    %9 = tpu.memref_slice %arg2[%c16_i32_7, %c0_i32_8] : memref<40x32xf32, #tpu.memory_space<any>> -> memref<24x32xf32, #tpu.memory_space<any>>
    %10 = tpu.memref_slice %arg3[%c1_i32_6] : memref<2x!tpu.dma_semaphore, #tpu.memory_space<semaphore_mem>> -> memref<1x!tpu.dma_semaphore, #tpu.memory_space<semaphore_mem>>
    %11 = tpu.memref_squeeze %10 : memref<1x!tpu.dma_semaphore, #tpu.memory_space<semaphore_mem>> -> memref<!tpu.dma_semaphore, #tpu.memory_space<semaphore_mem>>
    tpu.wait_dma2 semaphore(%11 : memref<!tpu.dma_semaphore, #tpu.memory_space<semaphore_mem>>) src(%arg1 : memref<24x32xf32, #tpu.memory_space<any>>) dst(%9 : memref<24x32xf32, #tpu.memory_space<any>>)
    return
  }
}

</mosaic_0001>

<llo_original>
// kernel: tpu_custom_call.1
$region0: #{tpu_custom_call.1}
  #allocation0 [shape = 'u32[]', space=smem, size = 0x4, offset = 0x4, fixed_abs, tag = 'smem constant byte address 0x4 - core index']
  #allocation1 [shape = 'u32[144,128]{1,0:T(1,128)}', space=vmem, size = 0x12000, scoped, tag = 'internal scratch']
  #allocation2 [shape = 's32[2]{0}', space=sflag, size = 0x8, scoped, tag = 'scratch operand']
  #allocation3 [shape = 's32[]', space=sflag, size = 0x4, offset = 0, fixed_abs, tag = 'sflag constant byte address 0x0 - dummy sync flag']
  #allocation4 [shape = 's32[]', space=sflag, size = 0x4, offset = 0, fixed_abs, tag = 'sflag constant byte address 0x0 - dummy sync flag']
  #allocation5 [shape = 'u32[]', space=smem, size = 0x4, offset = 0x44, fixed_abs, tag = 'smem constant byte address 0x44 - assertion arg 0']
  #allocation6 [shape = 'u32[]', space=smem, size = 0x4, offset = 0x48, fixed_abs, tag = 'smem constant byte address 0x48 - assertion arg 1']
  #allocation7 [shape = 's32[]', space=sflag, size = 0x4, offset = 0, fixed_abs, tag = 'sflag constant byte address 0x0 - dummy sync flag']
  #allocation8 [shape = 's32[]', space=sflag, size = 0x4, offset = 0, fixed_abs, tag = 'sflag constant byte address 0x0 - dummy sync flag']
  %s0 = inlined_call_operand.hbm [shape: f32[16,32], index: 0, kind: input, shape index: {}]
  %s1 = inlined_call_operand.hbm [shape: f32[24,32], index: 1, kind: input, shape index: {}]
  %s2 = inlined_call_operand.vmem [shape: f32[40,32], index: 2, kind: output, shape index: {}]
  %s3 = sld [smem:[#allocation0]]
  $region10: #{tpu_custom_call.1} parent=0
    _
  %s5 = ssub.s32 1, %s3
  %s6 = scalar_select 0, %s5, %s3
  // Predicated region
  $region2: #{tpu_custom_call.1} parent=0 // pred_check
    _
  $region3: #{tpu_custom_call.1} parent=0 // pred_check_branch
    %8 = sbr.rel target = $region5
  $region4: #{tpu_custom_call.1} parent=0 // pred_region
    %9 = sst [smem:[#allocation5]] [#allocation4]
    %10 = sst [smem:[#allocation6]] [#allocation3]
  $region5: #{tpu_custom_call.1} parent=0 // pred_fallthru
    _
  %12 = shalt.err (0)
  %s14 = sshll.u32 %s2, 4
  %s15 = int_to_ptr.vmem [resolvable:$true] %s14
  %17 = dma.hbm_to_vmem [thread:$0]  %s0, 256, %s15, [#allocation2]
  %s18 = scalar_lea.vmem %s2, 16
  %s19 = scalar_lea.sflag [#allocation2], 1
  // Predicated region
  $region6: #{tpu_custom_call.1} parent=0 // pred_check
    _
  $region7: #{tpu_custom_call.1} parent=0 // pred_check_branch
    %21 = sbr.rel target = $region9
  $region8: #{tpu_custom_call.1} parent=0 // pred_region
    %22 = sst [smem:[#allocation5]] [#allocation8]
    %23 = sst [smem:[#allocation6]] [#allocation7]
  $region9: #{tpu_custom_call.1} parent=0 // pred_fallthru
    _
  %25 = shalt.err (0)
  %s27 = sshll.u32 %s18, 4
  %s28 = int_to_ptr.vmem [resolvable:$true] %s27
  %30 = dma.hbm_to_vmem [thread:$0]  %s1, 384, %s28, %s19
  %s31 = smul.u32 16, 1
  %s32 = sshll.u32 %s31, 4
  %33 = dma.done [#allocation2], %s32
  %s34 = smul.u32 24, 1
  %s35 = sshll.u32 %s34, 4
  %36 = dma.done %s19, %s35
  %37 = vsyncmov [#allocation2]
  %s38 = vpop.sfrf %37
  %p39 = scmp.eq.s32.totalorder %s38, 0
  %p40 = pneg %p39
  %42 = shalt.err (%p40)
  %s43 = scalar_lea.sflag [#allocation2], 1
  %44 = vsyncmov %s43
  %s45 = vpop.sfrf %44
  %p46 = scmp.eq.s32.totalorder %s45, 0
  %p47 = pneg %p46
  %49 = shalt.err (%p47)

</llo_original>
